<compile_context>
chip_gen: v6e
topology: v6e:2x2x1
jax: 0.10.0
libtpu: 0.0.40
codegen_flags: <defaults>
</compile_context>

<pallas_src>
import math

import jax
import jax.numpy as jnp
from jax.experimental import pallas as pl
from jax.experimental.pallas import tpu as pltpu


def _round_up(v, m):
    return ((v + m - 1) // m) * m


def _patch_merge_kernel(x_ref, we_ref, wo_ref, b_ref, out_ref):
    # x_ref       : (tp, 2, Wh, 2C)  one contiguous slab of tp source-row pairs
    # we_ref/wo_ref: (2C, Co_pad)    gamma-folded, parity-split, lane-padded weights
    # b_ref       : (1, Co_pad)      beta folded through the reduction
    # out_ref     : (tm, Co_pad)     tm = tp * Wh merged tokens
    tm = out_ref.shape[0]
    c2 = x_ref.shape[-1]
    inv_n = 1.0 / (2.0 * c2)  # 1 / (4C)

    xb = x_ref[...]                                   # (tp, 2, Wh, 2C)
    # Free static parity split + leading-dim collapse (free view when
    # Wh % sublane == 0; otherwise Mosaic inserts a correct-but-slower relayout).
    ef = xb[:, 0].reshape(tm, c2).astype(jnp.float32)  # even rows -> [x0 | x2]
    of = xb[:, 1].reshape(tm, c2).astype(jnp.float32)  # odd rows  -> [x1 | x3]

    # Two-pass LayerNorm statistics over the full 4C group (biased var, eps=1e-5).
    s1 = jnp.sum(ef, axis=-1, keepdims=True) + jnp.sum(of, axis=-1, keepdims=True)
    mean = s1 * inv_n
    ec = ef - mean
    oc = of - mean
    var = (jnp.sum(ec * ec, axis=-1, keepdims=True)
           + jnp.sum(oc * oc, axis=-1, keepdims=True)) * inv_n
    inv = jax.lax.rsqrt(var + 1e-5)

    en = (ec * inv).astype(we_ref.dtype)
    on = (oc * inv).astype(wo_ref.dtype)

    # Split-K (K = 2C each) MXU dots summing into one f32 accumulator.
    acc = jnp.dot(en, we_ref[...], preferred_element_type=jnp.float32)
    acc = acc + jnp.dot(on, wo_ref[...], preferred_element_type=jnp.float32)
    acc = acc + b_ref[...]
    out_ref[...] = acc.astype(out_ref.dtype)


def patch_merging(x, input_resolution, gamma, beta, w_reduction, *,
                  target_rows=2048, mxu_dtype=None, pad_output_lanes=None):
    """Pallas PatchMerging forward.

    Args:
      x: (B, H*W, C) input features (f32 or bf16).
      input_resolution: (H, W).
      gamma, beta: (4C,) LayerNorm affine params.
      w_reduction: (2C, 4C) Linear weight (PyTorch out x in layout, no bias).
      target_rows: max merged-token rows per grid step (shrunk to fit VMEM).
      mxu_dtype: dtype used on the MXU (default bf16; pass jnp.float32 for
        a full-precision matmul path).
      pad_output_lanes: pad the output channel dim to a multiple of 128 for
        lane-dense stores (default: only when 2C is not already a multiple
        of 128); the padding is sliced off after the call.
    Returns:
      (B, H//2 * W//2, 2C)
    """
    H, W = input_resolution
    B, L, C = x.shape
    assert L == H * W, "input feature has wrong size"
    assert H % 2 == 0 and W % 2 == 0, f"x size ({H}*{W}) are not even."

    C2, C4, Co = 2 * C, 4 * C, 2 * C
    Wh = W // 2
    P = B * (H // 2)          # number of source row-pairs
    M = P * Wh                # number of merged tokens

    if mxu_dtype is None:
        mxu_dtype = jnp.bfloat16
    if pad_output_lanes is None:
        pad_output_lanes = (Co % 128) != 0
    Co_pad = _round_up(Co, 128) if pad_output_lanes else Co

    # Free (contiguous, row-major) view: (B, H*W, C) -> (P, 2, Wh, 2C).
    # dim 1 is the source-row parity dy; the last dim pairs (dx=0, dx=1).
    xv = x.reshape(P, 2, Wh, C2)

    # Host-side (one-time) prep: fold LayerNorm affine into the reduction
    # weight and a bias row; split / permute rows to match the kernel's
    # natural channel order ([x0,x2] for even rows, [x1,x3] for odd rows).
    w_t = w_reduction.astype(jnp.float32).T            # (4C, Co), rows = [x0,x1,x2,x3]
    w_g = gamma.astype(jnp.float32)[:, None] * w_t
    w_even = jnp.concatenate([w_g[0 * C:1 * C], w_g[2 * C:3 * C]], axis=0)  # (2C, Co)
    w_odd = jnp.concatenate([w_g[1 * C:2 * C], w_g[3 * C:4 * C]], axis=0)   # (2C, Co)
    b_fold = beta.astype(jnp.float32)[None, :] @ w_t                        # (1, Co)
    if Co_pad != Co:
        pad = [(0, 0), (0, Co_pad - Co)]
        w_even = jnp.pad(w_even, pad)
        w_odd = jnp.pad(w_odd, pad)
        b_fold = jnp.pad(b_fold, pad)
    w_even = w_even.astype(mxu_dtype)
    w_odd = w_odd.astype(mxu_dtype)

    in_item = jnp.dtype(x.dtype).itemsize
    out_item = in_item
    w_item = jnp.dtype(mxu_dtype).itemsize

    # Sublane alignment for the token dim (8 rows/f32-vreg, 16 for packed bf16).
    sub = 8 if in_item >= 4 else 16
    q = sub // math.gcd(Wh, sub)   # tp must be a multiple of q => tm % sub == 0

    # VMEM budget: query the chip, fall back to 64 MiB (v7x per-TC capacity).
    try:
        vmem_cap = int(pltpu.get_tpu_info().vmem_capacity_bytes)
        if not (16 << 20) <= vmem_cap <= (512 << 20):
            vmem_cap = 64 << 20
    except Exception:
        vmem_cap = 64 << 20
    budget = (vmem_cap * 7) // 10

    # Per-row-pair VMEM cost: double-buffered in/out blocks + in-kernel temps.
    per_tp = (2 * (2 * Wh * C2 * in_item)      # input block, double buffered
              + 2 * (Wh * Co_pad * out_item)   # output block, double buffered
              + 2 * Wh * C2 * 4                # ef / of f32 temporaries
              + 2 * Wh * C2 * w_item           # en / on MXU-dtype casts
              + Wh * Co_pad * 4)               # f32 accumulator
    # Weights/bias (assume double buffered; constant index_map) + slack.
    # TODO(synk): single-buffer the constant weight blocks (pl.Buffered(1))
    # once that pipeline_mode is confirmed on all target jax versions.
    fixed = 2 * (2 * C2 * Co_pad * w_item) + 2 * Co_pad * 4 + (2 << 20)

    if P <= q:
        tp = P                                  # single block == full array
    else:
        tp = max(q, ((max(1, target_rows // Wh)) // q) * q)
        tp = min(tp, (P // q) * q)
        if fixed < budget:
            tp_fit = max(q, (((budget - fixed) // per_tp) // q) * q)
            tp = min(tp, tp_fit)
        else:
            tp = q
        # Prefer an even number of grid steps (>= 2) so both v7x TensorCores
        # get balanced work on the "parallel" axis; costs at most ~half a
        # tile in the would-be-single-step case.  Harmless on v5e/v6e.
        for cand in range(tp, q - 1, -q):
            steps = -(-P // cand)
            if steps >= 2 and steps % 2 == 0:
                tp = cand
                break

    tm = tp * Wh
    grid = (-(-P // tp),)

    needed = fixed + per_tp * tp
    vmem_limit = int(min(max(needed + max(needed // 2, 4 << 20), 16 << 20),
                         (vmem_cap * 9) // 10))

    cost = pl.CostEstimate(
        flops=2 * M * C4 * Co_pad,
        transcendentals=M,
        bytes_accessed=(M * C4 * in_item + M * Co_pad * out_item
                        + 2 * C2 * Co_pad * w_item),
    )

    out = pl.pallas_call(
        _patch_merge_kernel,
        out_shape=jax.ShapeDtypeStruct((M, Co_pad), x.dtype),
        grid_spec=pltpu.PrefetchScalarGridSpec(
            num_scalar_prefetch=0,
            grid=grid,
            in_specs=[
                # one contiguous slab per step covering both row parities:
                pl.BlockSpec((tp, 2, Wh, C2), lambda i: (i, 0, 0, 0)),
                pl.BlockSpec((C2, Co_pad), lambda i: (0, 0)),
                pl.BlockSpec((C2, Co_pad), lambda i: (0, 0)),
                pl.BlockSpec((1, Co_pad), lambda i: (0, 0)),
            ],
            out_specs=pl.BlockSpec((tm, Co_pad), lambda i: (i, 0)),
        ),
        compiler_params=pltpu.CompilerParams(
            dimension_semantics=("parallel",),
            vmem_limit_bytes=vmem_limit,
        ),
        cost_estimate=cost,
    )(xv, w_even, w_odd, b_fold)

    if Co_pad != Co:
        out = out[:, :Co]
    return out.reshape(B, (H // 2) * Wh, Co)


def _reference(x, input_resolution, gamma, beta, w_reduction):
    """Pure-JAX reference matching the PyTorch forward."""
    H, W = input_resolution
    B, L, C = x.shape
    xg = x.reshape(B, H, W, C)
    x0 = xg[:, 0::2, 0::2, :]
    x1 = xg[:, 1::2, 0::2, :]
    x2 = xg[:, 0::2, 1::2, :]
    x3 = xg[:, 1::2, 1::2, :]
    xm = jnp.concatenate([x0, x1, x2, x3], axis=-1).reshape(B, -1, 4 * C)
    mean = jnp.mean(xm, axis=-1, keepdims=True)
    var = jnp.mean((xm - mean) ** 2, axis=-1, keepdims=True)
    xn = (xm - mean) / jnp.sqrt(var + 1e-5) * gamma + beta
    return jnp.einsum("blk,ok->blo", xn, w_reduction)


if __name__ == "__main__":
    key = jax.random.PRNGKey(0)
    k1, k2, k3, k4 = jax.random.split(key, 4)

    def make_inputs(B, H, W, C, dtype):
        x = jax.random.normal(k1, (B, H * W, C), dtype=jnp.float32)
        gamma = 1.0 + 0.1 * jax.random.normal(k2, (4 * C,), dtype=jnp.float32)
        beta = 0.1 * jax.random.normal(k3, (4 * C,), dtype=jnp.float32)
        w_red = 0.1 * jax.random.normal(k4, (2 * C, 4 * C), dtype=jnp.float32)
        return x.astype(dtype), gamma, beta, w_red

    # (B, H, W, C, in_dtype, target_rows, mxu_dtype, max_abs_err)
    cases = [
        (2, 16, 16, 16, jnp.float32, 2048, jnp.float32, 2e-3),   # full-precision path
        (2, 16, 16, 16, jnp.float32, 2048, None, 5e-2),          # default bf16-MXU path
        (2, 16, 16, 16, jnp.float32, 32, None, 5e-2),            # multi-step grid
        (1, 12, 16, 16, jnp.float32, 32, None, 5e-2),            # ragged last block
        (2, 16, 32, 32, jnp.bfloat16, 2048, None, 1.5e-1),       # bf16 input / output
    ]
    for (B, H, W, C, dt, tr, md, tol) in cases:
        x, gamma, beta, w_red = make_inputs(B, H, W, C, dt)
        y = patch_merging(x, (H, W), gamma, beta, w_red,
                          target_rows=tr, mxu_dtype=md)
        y = jax.block_until_ready(y)

        y_ref = _reference(x.astype(jnp.float32), (H, W), gamma, beta, w_red)
        assert y.shape == (B, (H // 2) * (W // 2), 2 * C), y.shape
        err = jnp.max(jnp.abs(y.astype(jnp.float32) - y_ref))
        assert float(err) < tol, (float(err), tol, (B, H, W, C, dt, tr, md))

    print("KERNEL_OK")
</pallas_src>

<mosaic_0001>
module attributes {stable_mosaic.version = 11 : i64} {
  func.func @_patch_merge_kernel(%arg0: i32, %arg1: memref<15x2x8x32xf32, #tpu.memory_space<vmem>>, %arg2: memref<32x128xf32, #tpu.memory_space<vmem>>, %arg3: memref<32x128xf32, #tpu.memory_space<vmem>>, %arg4: memref<1x128xf32, #tpu.memory_space<vmem>>, %arg5: memref<120x128xf32, #tpu.memory_space<vmem>>) attributes {dimension_semantics = [#tpu.dimension_semantics<parallel>], iteration_bounds = array<i64: 2>, scalar_prefetch = 0 : i64, scratch_operands = 0 : i64, tpu.core_type = #tpu.core_type<tc>, window_params = [{transform_indices = @transform_0, window_bounds = array<i64: 15, 2, 8, 32>}, {pipeline_mode = #tpu.pipeline_mode<synchronous>, transform_indices = @transform_1, window_bounds = array<i64: 32, 128>}, {pipeline_mode = #tpu.pipeline_mode<synchronous>, transform_indices = @transform_2, window_bounds = array<i64: 32, 128>}, {pipeline_mode = #tpu.pipeline_mode<synchronous>, transform_indices = @transform_3, window_bounds = array<i64: 1, 128>}, {transform_indices = @transform_4, window_bounds = array<i64: 120, 128>}]} {
    %c0 = arith.constant 0 : index
    %c0_0 = arith.constant 0 : index
    %c0_1 = arith.constant 0 : index
    %c0_2 = arith.constant 0 : index
    %0 = vector.load %arg1[%c0, %c0_0, %c0_1, %c0_2] : memref<15x2x8x32xf32, #tpu.memory_space<vmem>>, vector<15x2x8x32xf32>
    %1 = vector.extract_strided_slice %0 {offsets = [0, 0, 0, 0], sizes = [15, 1, 8, 32], strides = [1, 1, 1, 1]} : vector<15x2x8x32xf32> to vector<15x1x8x32xf32>
    %2 = vector.shape_cast %1 : vector<15x1x8x32xf32> to vector<15x8x32xf32>
    %3 = vector.shape_cast %2 : vector<15x8x32xf32> to vector<120x32xf32>
    %4 = vector.extract_strided_slice %0 {offsets = [0, 1, 0, 0], sizes = [15, 1, 8, 32], strides = [1, 1, 1, 1]} : vector<15x2x8x32xf32> to vector<15x1x8x32xf32>
    %5 = vector.shape_cast %4 : vector<15x1x8x32xf32> to vector<15x8x32xf32>
    %6 = vector.shape_cast %5 : vector<15x8x32xf32> to vector<120x32xf32>
    %cst = arith.constant dense<0.000000e+00> : vector<120xf32>
    %7 = vector.multi_reduction <add>, %3, %cst [1] : vector<120x32xf32> to vector<120xf32>
    %8 = vector.shape_cast %7 : vector<120xf32> to vector<120x1xf32>
    %cst_3 = arith.constant dense<0.000000e+00> : vector<120xf32>
    %9 = vector.multi_reduction <add>, %6, %cst_3 [1] : vector<120x32xf32> to vector<120xf32>
    %10 = vector.shape_cast %9 : vector<120xf32> to vector<120x1xf32>
    %11 = arith.addf %8, %10 : vector<120x1xf32>
    %cst_4 = arith.constant 1.562500e-02 : f32
    %12 = vector.broadcast %cst_4 : f32 to vector<120x1xf32>
    %13 = arith.mulf %11, %12 : vector<120x1xf32>
    %14 = vector.broadcast %13 : vector<120x1xf32> to vector<120x32xf32>
    %15 = arith.subf %3, %14 : vector<120x32xf32>
    %16 = vector.broadcast %13 : vector<120x1xf32> to vector<120x32xf32>
    %17 = arith.subf %6, %16 : vector<120x32xf32>
    %18 = arith.mulf %15, %15 : vector<120x32xf32>
    %cst_5 = arith.constant dense<0.000000e+00> : vector<120xf32>
    %19 = vector.multi_reduction <add>, %18, %cst_5 [1] : vector<120x32xf32> to vector<120xf32>
    %20 = vector.shape_cast %19 : vector<120xf32> to vector<120x1xf32>
    %21 = arith.mulf %17, %17 : vector<120x32xf32>
    %cst_6 = arith.constant dense<0.000000e+00> : vector<120xf32>
    %22 = vector.multi_reduction <add>, %21, %cst_6 [1] : vector<120x32xf32> to vector<120xf32>
    %23 = vector.shape_cast %22 : vector<120xf32> to vector<120x1xf32>
    %24 = arith.addf %20, %23 : vector<120x1xf32>
    %cst_7 = arith.constant 1.562500e-02 : f32
    %25 = vector.broadcast %cst_7 : f32 to vector<120x1xf32>
    %26 = arith.mulf %24, %25 : vector<120x1xf32>
    %cst_8 = arith.constant 9.99999974E-6 : f32
    %27 = vector.broadcast %cst_8 : f32 to vector<120x1xf32>
    %28 = arith.addf %26, %27 : vector<120x1xf32>
    %29 = math.rsqrt %28 : vector<120x1xf32>
    %30 = vector.broadcast %29 : vector<120x1xf32> to vector<120x32xf32>
    %31 = arith.mulf %15, %30 : vector<120x32xf32>
    %32 = vector.broadcast %29 : vector<120x1xf32> to vector<120x32xf32>
    %33 = arith.mulf %17, %32 : vector<120x32xf32>
    %c0_9 = arith.constant 0 : index
    %c0_10 = arith.constant 0 : index
    %34 = vector.load %arg2[%c0_9, %c0_10] : memref<32x128xf32, #tpu.memory_space<vmem>>, vector<32x128xf32>
    %cst_11 = arith.constant dense<0.000000e+00> : vector<120x128xf32>
    %35 = tpu.matmul %31, %34, %cst_11 {dimension_numbers = #tpu.dot_dimension_numbers<[1], [0], [0], [1], [0, 0, 1, 1], [], []>} : vector<120x32xf32>, vector<32x128xf32>, vector<120x128xf32> -> vector<120x128xf32>
    %c0_12 = arith.constant 0 : index
    %c0_13 = arith.constant 0 : index
    %36 = vector.load %arg3[%c0_12, %c0_13] : memref<32x128xf32, #tpu.memory_space<vmem>>, vector<32x128xf32>
    %cst_14 = arith.constant dense<0.000000e+00> : vector<120x128xf32>
    %37 = tpu.matmul %33, %36, %cst_14 {dimension_numbers = #tpu.dot_dimension_numbers<[1], [0], [0], [1], [0, 0, 1, 1], [], []>} : vector<120x32xf32>, vector<32x128xf32>, vector<120x128xf32> -> vector<120x128xf32>
    %38 = arith.addf %35, %37 : vector<120x128xf32>
    %c0_15 = arith.constant 0 : index
    %c0_16 = arith.constant 0 : index
    %39 = vector.load %arg4[%c0_15, %c0_16] : memref<1x128xf32, #tpu.memory_space<vmem>>, vector<1x128xf32>
    %40 = vector.broadcast %39 : vector<1x128xf32> to vector<120x128xf32>
    %41 = arith.addf %38, %40 : vector<120x128xf32>
    %c0_17 = arith.constant 0 : index
    %c0_18 = arith.constant 0 : index
    %42 = vector.load %arg5[%c0_17, %c0_18] : memref<120x128xf32, #tpu.memory_space<vmem>>, vector<120x128xf32>
    tpu.vector_store %arg5[%c0_17, %c0_18], %41 {strides = array<i32>} : memref<120x128xf32, #tpu.memory_space<vmem>>, vector<120x128xf32>,
    return
  }
  func.func @transform_0(%arg0: i32) -> (i32, i32, i32, i32) {
    %c0_i32 = arith.constant 0 : i32
    %c0_i32_0 = arith.constant 0 : i32
    %c0_i32_1 = arith.constant 0 : i32
    %c0_i32_2 = arith.constant 0 : i32
    return %arg0, %c0_i32, %c0_i32_0, %c0_i32_1 : i32, i32, i32, i32
  }
  func.func @transform_1(%arg0: i32) -> (i32, i32) {
    %c0_i32 = arith.constant 0 : i32
    %c0_i32_0 = arith.constant 0 : i32
    %c0_i32_1 = arith.constant 0 : i32
    return %c0_i32, %c0_i32_0 : i32, i32
  }
  func.func @transform_2(%arg0: i32) -> (i32, i32) {
    %c0_i32 = arith.constant 0 : i32
    %c0_i32_0 = arith.constant 0 : i32
    %c0_i32_1 = arith.constant 0 : i32
    return %c0_i32, %c0_i32_0 : i32, i32
  }
  func.func @transform_3(%arg0: i32) -> (i32, i32) {
    %c0_i32 = arith.constant 0 : i32
    %c0_i32_0 = arith.constant 0 : i32
    %c0_i32_1 = arith.constant 0 : i32
    return %c0_i32, %c0_i32_0 : i32, i32
  }
  func.func @transform_4(%arg0: i32) -> (i32, i32) {
    %c0_i32 = arith.constant 0 : i32
    %c0_i32_0 = arith.constant 0 : i32
    return %arg0, %c0_i32 : i32, i32
  }
}

</mosaic_0001>

<llo_original>
// kernel: tpu_custom_call.1
$region0: #{tpu_custom_call.1}
  #allocation0 [shape = 'u32[]', space=smem, size = 0x4, offset = 0x4, fixed_abs, tag = 'smem constant byte address 0x4 - core index']
  #allocation1 [shape = 'u32[144,128]{1,0:T(1,128)}', space=vmem, size = 0x12000, scoped, tag = 'internal scratch']
  %s0 = inlined_call_operand.hbm [shape: f32[16,2,8,32], index: 0, kind: input, shape index: {}]
  %s1 = inlined_call_operand.hbm [shape: f32[32,128], index: 1, kind: input, shape index: {}]
  %s2 = inlined_call_operand.hbm [shape: f32[32,128], index: 2, kind: input, shape index: {}]
  %s3 = inlined_call_operand.vmem [shape: f32[1,128], index: 3, kind: input, shape index: {}]
  %s4 = inlined_call_operand.hbm [shape: f32[128,128], index: 4, kind: output, shape index: {}]
  %s5 = sld [smem:[#allocation0]]
  $region61: #{tpu_custom_call.1} parent=0
    _
  %s7 = ssub.s32 1, %s5
  %s8 = scalar_select 0, %s7, %s5
  $region1: #{tpu_custom_call.1} parent=0
    #allocation2 [shape = 'u8[245760]{0}', space=vmem, size = 0x3c000, scoped, tag = 'input window, operand 0']
    #allocation3 [shape = 's32[2]{0}', space=sflag, size = 0x8, scoped, tag = 'scoped memory for tpu_custom_call.1']
    #allocation4 [shape = 's32[2]{0}', space=sflag, size = 0x8, scoped, tag = 'scoped memory for tpu_custom_call.1']
    #allocation5 [shape = 'u8[16384]{0}', space=vmem, size = 0x4000, scoped, tag = 'input window, operand 1, single buffered']
    #allocation6 [shape = 's32[1]{0}', space=sflag, size = 0x4, scoped, tag = 'scoped memory for tpu_custom_call.1']
    #allocation7 [shape = 'u8[16384]{0}', space=vmem, size = 0x4000, scoped, tag = 'input window, operand 2, single buffered']
    #allocation8 [shape = 'u8[122880]{0}', space=vmem, size = 0x1e000, scoped, tag = 'output window, operand 0']
    %9 = vsyncpa [#allocation3], 0
    %s10 = scalar_lea.sflag [#allocation3], 1
    %11 = vsyncpa %s10, 0
    %12 = vsyncpa [#allocation6], 0
    %13 = vsyncpa [#allocation4], 0
    %s14 = scalar_lea.sflag [#allocation4], 1
    %15 = vsyncpa %s14, 0
    loop: start=0, step=1, limit=4
    $region2: #{tpu_custom_call.1} parent=1 // loop_pre_header
      _
    $region3: #{tpu_custom_call.1} parent=1 // loop_header
      %s17 = sphi 0, %s21
      %p18 = scmp.ge.s32.totalorder %s17, 4
      %s27 = sphi 0, %s29
      %s30 = sphi 0, %s27
      %s31 = sphi 0, %s30
      %s47 = sphi 0, %s31
      %s51 = sphi 0, %s51
      %s53 = sphi 0, %s51
      %s54 = sphi 0, %s53
      %s68 = sphi 0, %s54
      %s72 = sphi 0, %s72
      %s74 = sphi 0, %s72
      %s75 = sphi 0, %s74
      %s89 = sphi 0, %s75
      %s93 = sphi 0, %s93
      %s95 = sphi 0, %s93
      %s96 = sphi 0, %s95
      %s110 = sphi 0, %s96
      %s116 = sphi 0, %s118
      %s119 = sphi 0, %s116
      %s120 = sphi 0, %s119
      %s136 = sphi 0, %s120
    $region4: #{tpu_custom_call.1} parent=1 // loop_header_branch
      %20 = sbr.rel (%p18) target = $region8
    $region5: #{tpu_custom_call.1} parent=1 // loop_body
      %s22 = ssub.s32 %s17, 1
      %s23 = ssub.s32 %s17, 2
      %s24 = sadd.s32 %s17, 1
      %s25 = ssub.s32 %s17, %s24
      %p26 = scmp.eq.s32.totalorder %s25, 0
      %s28 = sadd.s32 %s27, 1
      %s29 = scalar_select %p26, %s27, %s28
      %p32 = pneg %p26
      %p33 = scmp.eq.s32.totalorder %s17, 1
      %p34 = por %p32, %p33
      %p35 = scmp.ne.s32.totalorder %s27, %s30
      %p36 = scmp.eq.s32.totalorder %s17, 0
      %p37 = por %p35, %p36
      %p38 = scmp.ne.s32.totalorder %s27, %s30
      %p39 = scmp.eq.s32.totalorder %s22, 1
      %p40 = por %p38, %p39
      %p41 = scmp.ne.s32.totalorder %s30, %s31
      %p42 = scmp.eq.s32.totalorder %s22, 0
      %p43 = por %p41, %p42
      %p44 = scmp.ne.s32.totalorder %s30, %s31
      %p45 = scmp.eq.s32.totalorder %s23, 1
      %p46 = por %p44, %p45
      %p48 = scmp.ne.s32.totalorder %s31, %s47
      %p49 = scmp.eq.s32.totalorder %s23, 0
      %p50 = por %p48, %p49
      %s52 = sadd.s32 %s51, 1
      %p55 = scmp.eq.s32.totalorder %s17, 1
      %p56 = scmp.ne.s32.totalorder %s51, %s53
      %p57 = scmp.eq.s32.totalorder %s17, 0
      %p58 = por %p56, %p57
      %p59 = scmp.ne.s32.totalorder %s51, %s53
      %p60 = scmp.eq.s32.totalorder %s22, 1
      %p61 = por %p59, %p60
      %p62 = scmp.ne.s32.totalorder %s53, %s54
      %p63 = scmp.eq.s32.totalorder %s22, 0
      %p64 = por %p62, %p63
      %p65 = scmp.ne.s32.totalorder %s53, %s54
      %p66 = scmp.eq.s32.totalorder %s23, 1
      %p67 = por %p65, %p66
      %p69 = scmp.ne.s32.totalorder %s54, %s68
      %p70 = scmp.eq.s32.totalorder %s23, 0
      %p71 = por %p69, %p70
      %s73 = sadd.s32 %s72, 1
      %p76 = scmp.eq.s32.totalorder %s17, 1
      %p77 = scmp.ne.s32.totalorder %s72, %s74
      %p78 = scmp.eq.s32.totalorder %s17, 0
      %p79 = por %p77, %p78
      %p80 = scmp.ne.s32.totalorder %s72, %s74
      %p81 = scmp.eq.s32.totalorder %s22, 1
      %p82 = por %p80, %p81
      %p83 = scmp.ne.s32.totalorder %s74, %s75
      %p84 = scmp.eq.s32.totalorder %s22, 0
      %p85 = por %p83, %p84
      %p86 = scmp.ne.s32.totalorder %s74, %s75
      %p87 = scmp.eq.s32.totalorder %s23, 1
      %p88 = por %p86, %p87
      %p90 = scmp.ne.s32.totalorder %s75, %s89
      %p91 = scmp.eq.s32.totalorder %s23, 0
      %p92 = por %p90, %p91
      %s94 = sadd.s32 %s93, 1
      %p97 = scmp.eq.s32.totalorder %s17, 1
      %p98 = scmp.ne.s32.totalorder %s93, %s95
      %p99 = scmp.eq.s32.totalorder %s17, 0
      %p100 = por %p98, %p99
      %p101 = scmp.ne.s32.totalorder %s93, %s95
      %p102 = scmp.eq.s32.totalorder %s22, 1
      %p103 = por %p101, %p102
      %p104 = scmp.ne.s32.totalorder %s95, %s96
      %p105 = scmp.eq.s32.totalorder %s22, 0
      %p106 = por %p104, %p105
      %p107 = scmp.ne.s32.totalorder %s95, %s96
      %p108 = scmp.eq.s32.totalorder %s23, 1
      %p109 = por %p107, %p108
      %p111 = scmp.ne.s32.totalorder %s96, %s110
      %p112 = scmp.eq.s32.totalorder %s23, 0
      %p113 = por %p111, %p112
      %s114 = ssub.s32 %s17, %s24
      %p115 = scmp.eq.s32.totalorder %s114, 0
      %s117 = sadd.s32 %s116, 1
      %s118 = scalar_select %p115, %s116, %s117
      %p121 = pneg %p115
      %p122 = scmp.eq.s32.totalorder %s17, 1
      %p123 = por %p121, %p122
      %p124 = scmp.ne.s32.totalorder %s116, %s119
      %p125 = scmp.eq.s32.totalorder %s17, 0
      %p126 = por %p124, %p125
      %p127 = scmp.ne.s32.totalorder %s116, %s119
      %p128 = scmp.eq.s32.totalorder %s22, 1
      %p129 = por %p127, %p128
      %p130 = scmp.ne.s32.totalorder %s119, %s120
      %p131 = scmp.eq.s32.totalorder %s22, 0
      %p132 = por %p130, %p131
      %p133 = scmp.ne.s32.totalorder %s119, %s120
      %p134 = scmp.eq.s32.totalorder %s23, 1
      %p135 = por %p133, %p134
      %p137 = scmp.ne.s32.totalorder %s120, %s136
      %p138 = scmp.eq.s32.totalorder %s23, 0
      %p139 = por %p137, %p138
      %p140 = scmp.le.s32.totalorder 1, %s17
      %p141 = scmp.lt.s32.totalorder %s17, 3
      %p142 = pnand %p140, %p141
      %p143 = pneg %p142
      // Predicated region
      $region9: #{tpu_custom_call.1} parent=5 // pred_check
        _
      $region10: #{tpu_custom_call.1} parent=5 // pred_check_branch
        %145 = sbr.rel (%p142) target = $region12
      $region11: #{tpu_custom_call.1} parent=5 // pred_region
        %s146 = ssub.s32 %s17, 1
        // Predicated region
        $region13: #{tpu_custom_call.1} parent=11 // pred_check
          %p147 = pneg %p64
        $region14: #{tpu_custom_call.1} parent=11 // pred_check_branch
          %149 = sbr.rel (%p147) target = $region16
        $region15: #{tpu_custom_call.1} parent=11 // pred_region
          %s151 = ssub.s32 512, 512
          %152 = vsyncadd [#allocation6], %s151
          %s153 = sshll.u32 [#allocation5], 4
          %s154 = int_to_ptr.vmem [resolvable:$true] %s153
          %159 = dma.hbm_to_vmem [thread:$0]  %s1, 512, %s154, [#allocation6], 128, 128, 8
        $region16: #{tpu_custom_call.1} parent=11 // pred_fallthru
          _
        // Predicated region
        $region17: #{tpu_custom_call.1} parent=11 // pred_check
          %p160 = pneg %p85
        $region18: #{tpu_custom_call.1} parent=11 // pred_check_branch
          %162 = sbr.rel (%p160) target = $region20
        $region19: #{tpu_custom_call.1} parent=11 // pred_region
          %s164 = ssub.s32 512, 512
          %165 = vsyncadd [#allocation6], %s164
          %s166 = sshll.u32 [#allocation7], 4
          %s167 = int_to_ptr.vmem [resolvable:$true] %s166
          %172 = dma.hbm_to_vmem [thread:$0]  %s2, 512, %s167, [#allocation6], 128, 128, 8
        $region20: #{tpu_custom_call.1} parent=11 // pred_fallthru
          _
        // Predicated region
        $region21: #{tpu_custom_call.1} parent=11 // pred_check
          %p173 = pneg %p106
        $region22: #{tpu_custom_call.1} parent=11 // pred_check_branch
          %175 = sbr.rel (%p173) target = $region24
        $region23: #{tpu_custom_call.1} parent=11 // pred_region
          _
        $region24: #{tpu_custom_call.1} parent=11 // pred_fallthru
          _
      $region12: #{tpu_custom_call.1} parent=5 // pred_fallthru
        _
      %p176 = scmp.lt.s32.totalorder %s17, 2
      // Predicated region
      $region25: #{tpu_custom_call.1} parent=5 // pred_check
        %p177 = pneg %p176
      $region26: #{tpu_custom_call.1} parent=5 // pred_check_branch
        %179 = sbr.rel (%p177) target = $region28
      $region27: #{tpu_custom_call.1} parent=5 // pred_region
        // Predicated region
        $region29: #{tpu_custom_call.1} parent=27 // pred_check
          %p180 = pneg %p37
        $region30: #{tpu_custom_call.1} parent=27 // pred_check_branch
          %182 = sbr.rel (%p180) target = $region32
        $region31: #{tpu_custom_call.1} parent=27 // pred_region
          %s183 = sand.u32 %s27, 1
          %s184 = scalar_lea.sflag [#allocation3], %s183
          %s185 = sand.u32 %s27, 1
          %s186 = smul.addr %s185, 240
          %s187 = scalar_lea.vmem [#allocation2], %s186
          %s188 = smul.u32 15, %s17
          %s189 = ssub.s32 16, %s188
          %p190 = scmp.lt.s32.totalorder %s189, 15
          %s191 = scalar_select %p190, %s189, 15
          %s192 = smul.u32 128, %s191
          %s193 = smul.u32 %s192, 2
          %s195 = ssub.s32 3840, %s193
          %196 = vsyncadd %s184, %s195
          %p197 = scmp.ne.s32.totalorder 0, %s193
          %s198 = smul.addr %s188, 2
          %s199 = smul.addr %s198, 128
          %s200 = scalar_lea.hbm %s0, %s199
          %s201 = smul.u32 %s191, 2
          %s202 = smul.u32 8, %s201
          %s203 = sshll.u32 %s187, 4
          %s204 = int_to_ptr.vmem [resolvable:$true] %s203
          %s205 = sshll.u32 %s202, 4
          %209 = dma.hbm_to_vmem [thread:$0]  (%p197), %s200, %s205, %s204, %s184, 128, 128, 8
        $region32: #{tpu_custom_call.1} parent=27 // pred_fallthru
          _
      $region28: #{tpu_custom_call.1} parent=5 // pred_fallthru
        _
      %p210 = scmp.le.s32.totalorder 1, %s17
      %p211 = scmp.lt.s32.totalorder %s17, 3
      %p212 = pnand %p210, %p211
      %p213 = pneg %p212
      // Predicated region
      $region33: #{tpu_custom_call.1} parent=5 // pred_check
        _
      $region34: #{tpu_custom_call.1} parent=5 // pred_check_branch
        %215 = sbr.rel (%p212) target = $region36
      $region35: #{tpu_custom_call.1} parent=5 // pred_region
        %s216 = ssub.s32 %s17, 1
        %s217 = sand.u32 %s30, 1
        %s218 = scalar_lea.sflag [#allocation3], %s217
        %s219 = sand.u32 %s30, 1
        %s220 = smul.addr %s219, 240
        %s221 = scalar_lea.vmem [#allocation2], %s220
        // Predicated region
        $region37: #{tpu_custom_call.1} parent=35 // pred_check
          %p222 = pneg %p43
        $region38: #{tpu_custom_call.1} parent=35 // pred_check_branch
          %224 = sbr.rel (%p222) target = $region40
        $region39: #{tpu_custom_call.1} parent=35 // pred_region
          %225 = dma.done %s218, 3840
        $region40: #{tpu_custom_call.1} parent=35 // pred_fallthru
          _
        // Predicated region
        $region41: #{tpu_custom_call.1} parent=35 // pred_check
          %p226 = pneg %p64
        $region42: #{tpu_custom_call.1} parent=35 // pred_check_branch
          %228 = sbr.rel (%p226) target = $region44
        $region43: #{tpu_custom_call.1} parent=35 // pred_region
          %229 = dma.done [#allocation6], 512
        $region44: #{tpu_custom_call.1} parent=35 // pred_fallthru
          _
        // Predicated region
        $region45: #{tpu_custom_call.1} parent=35 // pred_check
          %p230 = pneg %p85
        $region46: #{tpu_custom_call.1} parent=35 // pred_check_branch
          %232 = sbr.rel (%p230) target = $region48
        $region47: #{tpu_custom_call.1} parent=35 // pred_region
          %233 = dma.done [#allocation6], 512
        $region48: #{tpu_custom_call.1} parent=35 // pred_fallthru
          _
        %s234 = sand.u32 %s30, 1
        %s235 = scalar_lea.sflag [#allocation3], %s234
        %s236 = sand.u32 %s30, 1
        %s237 = smul.addr %s236, 240
        %s238 = scalar_lea.vmem [#allocation2], %s237
        %p239 = pneg %p43
        %p240 = pneg %p40
        %p241 = pneg %p64
        %p242 = pneg %p61
        %p243 = pneg %p85
        %p244 = pneg %p82
        %p245 = pneg %p106
        %p246 = pneg %p103
        %p247 = pneg %p132
        %p248 = pneg %p129
        %s249 = sand.u32 %s119, 1
        %s250 = scalar_lea.sflag [#allocation4], %s249
        %s251 = sand.u32 %s119, 1
        %s252 = smul.addr %s251, 120
        %s253 = scalar_lea.vmem [#allocation8], %s252
        %s254 = smul.u32 15, %s22
        %s255 = ssub.s32 16, %s254
        %p256 = scmp.lt.s32.totalorder %s255, 15
        %s257 = scalar_select %p256, %s255, 15
        %s258 = smul.u32 128, %s257
        %s259 = smul.u32 %s258, 2
        %s260 = smul.u32 15, %s22
        %s261 = ssub.s32 16, %s260
        %p262 = scmp.lt.s32.totalorder %s261, 15
        %s263 = scalar_select %p262, %s261, 15
        %s264 = smul.u32 128, %s263
        %v265 = vld [vmem:[%s221] sm:$0xff]
        %v266 = vld [vmem:[%s221 + $0x8] sm:$0xff]
        %v267 = vld [vmem:[%s221 + $0x10] sm:$0xff]
        %v268 = vld [vmem:[%s221 + $0x18] sm:$0xff]
        %v269 = vld [vmem:[%s221 + $0x20] sm:$0xff]
        %v270 = vld [vmem:[%s221 + $0x28] sm:$0xff]
        %v271 = vld [vmem:[%s221 + $0x30] sm:$0xff]
        %v272 = vld [vmem:[%s221 + $0x38] sm:$0xff]
        %v273 = vld [vmem:[%s221 + $0x40] sm:$0xff]
        %v274 = vld [vmem:[%s221 + $0x48] sm:$0xff]
        %v275 = vld [vmem:[%s221 + $0x50] sm:$0xff]
        %v276 = vld [vmem:[%s221 + $0x58] sm:$0xff]
        %v277 = vld [vmem:[%s221 + $0x60] sm:$0xff]
        %v278 = vld [vmem:[%s221 + $0x68] sm:$0xff]
        %v279 = vld [vmem:[%s221 + $0x70] sm:$0xff]
        %v280 = vld [vmem:[%s221 + $0x78] sm:$0xff]
        %v281 = vld [vmem:[%s221 + $0x80] sm:$0xff]
        %v282 = vld [vmem:[%s221 + $0x88] sm:$0xff]
        %v283 = vld [vmem:[%s221 + $0x90] sm:$0xff]
        %v284 = vld [vmem:[%s221 + $0x98] sm:$0xff]
        %v285 = vld [vmem:[%s221 + $0xa0] sm:$0xff]
        %v286 = vld [vmem:[%s221 + $0xa8] sm:$0xff]
        %v287 = vld [vmem:[%s221 + $0xb0] sm:$0xff]
        %v288 = vld [vmem:[%s221 + $0xb8] sm:$0xff]
        %v289 = vld [vmem:[%s221 + $0xc0] sm:$0xff]
        %v290 = vld [vmem:[%s221 + $0xc8] sm:$0xff]
        %v291 = vld [vmem:[%s221 + $0xd0] sm:$0xff]
        %v292 = vld [vmem:[%s221 + $0xd8] sm:$0xff]
        %v293 = vld [vmem:[%s221 + $0xe0] sm:$0xff]
        %v294 = vld [vmem:[%s221 + $0xe8] sm:$0xff]
        %vm295 = vcmask 261120
        %v296 = vsel %vm295, %v265, 0.0
        %297 = vadd.xlane.f32.xlu0 %v296
        %v298 = vpop.xlane.xlu0 %297
        %v299 = vsel %vm295, %v267, 0.0
        %300 = vadd.xlane.f32.xlu0 %v299
        %v301 = vpop.xlane.xlu0 %300
        %v302 = vsel %vm295, %v269, 0.0
        %303 = vadd.xlane.f32.xlu0 %v302
        %v304 = vpop.xlane.xlu0 %303
        %v305 = vsel %vm295, %v271, 0.0
        %306 = vadd.xlane.f32.xlu0 %v305
        %v307 = vpop.xlane.xlu0 %306
        %v308 = vsel %vm295, %v273, 0.0
        %309 = vadd.xlane.f32.xlu0 %v308
        %v310 = vpop.xlane.xlu0 %309
        %v311 = vsel %vm295, %v275, 0.0
        %312 = vadd.xlane.f32.xlu0 %v311
        %v313 = vpop.xlane.xlu0 %312
        %v314 = vsel %vm295, %v277, 0.0
        %315 = vadd.xlane.f32.xlu0 %v314
        %v316 = vpop.xlane.xlu0 %315
        %v317 = vsel %vm295, %v279, 0.0
        %318 = vadd.xlane.f32.xlu0 %v317
        %v319 = vpop.xlane.xlu0 %318
        %v320 = vsel %vm295, %v281, 0.0
        %321 = vadd.xlane.f32.xlu0 %v320
        %v322 = vpop.xlane.xlu0 %321
        %v323 = vsel %vm295, %v283, 0.0
        %324 = vadd.xlane.f32.xlu0 %v323
        %v325 = vpop.xlane.xlu0 %324
        %v326 = vsel %vm295, %v285, 0.0
        %327 = vadd.xlane.f32.xlu0 %v326
        %v328 = vpop.xlane.xlu0 %327
        %v329 = vsel %vm295, %v287, 0.0
        %330 = vadd.xlane.f32.xlu0 %v329
        %v331 = vpop.xlane.xlu0 %330
        %v332 = vsel %vm295, %v289, 0.0
        %333 = vadd.xlane.f32.xlu0 %v332
        %v334 = vpop.xlane.xlu0 %333
        %v335 = vsel %vm295, %v291, 0.0
        %336 = vadd.xlane.f32.xlu0 %v335
        %v337 = vpop.xlane.xlu0 %336
        %v338 = vsel %vm295, %v293, 0.0
        %339 = vadd.xlane.f32.xlu0 %v338
        %v340 = vpop.xlane.xlu0 %339
        %v341 = vsel %vm295, %v266, 0.0
        %342 = vadd.xlane.f32.xlu0 %v341
        %v343 = vpop.xlane.xlu0 %342
        %v344 = vsel %vm295, %v268, 0.0
        %345 = vadd.xlane.f32.xlu0 %v344
        %v346 = vpop.xlane.xlu0 %345
        %v347 = vsel %vm295, %v270, 0.0
        %348 = vadd.xlane.f32.xlu0 %v347
        %v349 = vpop.xlane.xlu0 %348
        %v350 = vsel %vm295, %v272, 0.0
        %351 = vadd.xlane.f32.xlu0 %v350
        %v352 = vpop.xlane.xlu0 %351
        %v353 = vsel %vm295, %v274, 0.0
        %354 = vadd.xlane.f32.xlu0 %v353
        %v355 = vpop.xlane.xlu0 %354
        %v356 = vsel %vm295, %v276, 0.0
        %357 = vadd.xlane.f32.xlu0 %v356
        %v358 = vpop.xlane.xlu0 %357
        %v359 = vsel %vm295, %v278, 0.0
        %360 = vadd.xlane.f32.xlu0 %v359
        %v361 = vpop.xlane.xlu0 %360
        %v362 = vsel %vm295, %v280, 0.0
        %363 = vadd.xlane.f32.xlu0 %v362
        %v364 = vpop.xlane.xlu0 %363
        %v365 = vsel %vm295, %v282, 0.0
        %366 = vadd.xlane.f32.xlu0 %v365
        %v367 = vpop.xlane.xlu0 %366
        %v368 = vsel %vm295, %v284, 0.0
        %369 = vadd.xlane.f32.xlu0 %v368
        %v370 = vpop.xlane.xlu0 %369
        %v371 = vsel %vm295, %v286, 0.0
        %372 = vadd.xlane.f32.xlu0 %v371
        %v373 = vpop.xlane.xlu0 %372
        %v374 = vsel %vm295, %v288, 0.0
        %375 = vadd.xlane.f32.xlu0 %v374
        %v376 = vpop.xlane.xlu0 %375
        %v377 = vsel %vm295, %v290, 0.0
        %378 = vadd.xlane.f32.xlu0 %v377
        %v379 = vpop.xlane.xlu0 %378
        %v380 = vsel %vm295, %v292, 0.0
        %381 = vadd.xlane.f32.xlu0 %v380
        %v382 = vpop.xlane.xlu0 %381
        %v383 = vsel %vm295, %v294, 0.0
        %384 = vadd.xlane.f32.xlu0 %v383
        %v385 = vpop.xlane.xlu0 %384
        %v386 = vadd.f32 %v298, %v343
        %v387 = vadd.f32 %v301, %v346
        %v388 = vadd.f32 %v304, %v349
        %v389 = vadd.f32 %v307, %v352
        %v390 = vadd.f32 %v310, %v355
        %v391 = vadd.f32 %v313, %v358
        %v392 = vadd.f32 %v316, %v361
        %v393 = vadd.f32 %v319, %v364
        %v394 = vadd.f32 %v322, %v367
        %v395 = vadd.f32 %v325, %v370
        %v396 = vadd.f32 %v328, %v373
        %v397 = vadd.f32 %v331, %v376
        %v398 = vadd.f32 %v334, %v379
        %v399 = vadd.f32 %v337, %v382
        %v400 = vadd.f32 %v340, %v385
        %v401 = vmul.f32 %v386, 0.015625
        %v402 = vmul.f32 %v387, 0.015625
        %v403 = vmul.f32 %v388, 0.015625
        %v404 = vmul.f32 %v389, 0.015625
        %v405 = vmul.f32 %v390, 0.015625
        %v406 = vmul.f32 %v391, 0.015625
        %v407 = vmul.f32 %v392, 0.015625
        %v408 = vmul.f32 %v393, 0.015625
        %v409 = vmul.f32 %v394, 0.015625
        %v410 = vmul.f32 %v395, 0.015625
        %v411 = vmul.f32 %v396, 0.015625
        %v412 = vmul.f32 %v397, 0.015625
        %v413 = vmul.f32 %v398, 0.015625
        %v414 = vmul.f32 %v399, 0.015625
        %v415 = vmul.f32 %v400, 0.015625
        %v416 = vsub.f32 %v265, %v401
        %v417 = vsub.f32 %v267, %v402
        %v418 = vsub.f32 %v269, %v403
        %v419 = vsub.f32 %v271, %v404
        %v420 = vsub.f32 %v273, %v405
        %v421 = vsub.f32 %v275, %v406
        %v422 = vsub.f32 %v277, %v407
        %v423 = vsub.f32 %v279, %v408
        %v424 = vsub.f32 %v281, %v409
        %v425 = vsub.f32 %v283, %v410
        %v426 = vsub.f32 %v285, %v411
        %v427 = vsub.f32 %v287, %v412
        %v428 = vsub.f32 %v289, %v413
        %v429 = vsub.f32 %v291, %v414
        %v430 = vsub.f32 %v293, %v415
        %v431 = vsub.f32 %v266, %v401
        %v432 = vsub.f32 %v268, %v402
        %v433 = vsub.f32 %v270, %v403
        %v434 = vsub.f32 %v272, %v404
        %v435 = vsub.f32 %v274, %v405
        %v436 = vsub.f32 %v276, %v406
        %v437 = vsub.f32 %v278, %v407
        %v438 = vsub.f32 %v280, %v408
        %v439 = vsub.f32 %v282, %v409
        %v440 = vsub.f32 %v284, %v410
        %v441 = vsub.f32 %v286, %v411
        %v442 = vsub.f32 %v288, %v412
        %v443 = vsub.f32 %v290, %v413
        %v444 = vsub.f32 %v292, %v414
        %v445 = vsub.f32 %v294, %v415
        %v446 = vmul.f32 %v416, %v416
        %v447 = vmul.f32 %v417, %v417
        %v448 = vmul.f32 %v418, %v418
        %v449 = vmul.f32 %v419, %v419
        %v450 = vmul.f32 %v420, %v420
        %v451 = vmul.f32 %v421, %v421
        %v452 = vmul.f32 %v422, %v422
        %v453 = vmul.f32 %v423, %v423
        %v454 = vmul.f32 %v424, %v424
        %v455 = vmul.f32 %v425, %v425
        %v456 = vmul.f32 %v426, %v426
        %v457 = vmul.f32 %v427, %v427
        %v458 = vmul.f32 %v428, %v428
        %v459 = vmul.f32 %v429, %v429
        %v460 = vmul.f32 %v430, %v430
        %v461 = vsel %vm295, %v446, 0.0
        %462 = vadd.xlane.f32.xlu0 %v461
        %v463 = vpop.xlane.xlu0 %462
        %v464 = vsel %vm295, %v447, 0.0
        %465 = vadd.xlane.f32.xlu0 %v464
        %v466 = vpop.xlane.xlu0 %465
        %v467 = vsel %vm295, %v448, 0.0
        %468 = vadd.xlane.f32.xlu0 %v467
        %v469 = vpop.xlane.xlu0 %468
        %v470 = vsel %vm295, %v449, 0.0
        %471 = vadd.xlane.f32.xlu0 %v470
        %v472 = vpop.xlane.xlu0 %471
        %v473 = vsel %vm295, %v450, 0.0
        %474 = vadd.xlane.f32.xlu0 %v473
        %v475 = vpop.xlane.xlu0 %474
        %v476 = vsel %vm295, %v451, 0.0
        %477 = vadd.xlane.f32.xlu0 %v476
        %v478 = vpop.xlane.xlu0 %477
        %v479 = vsel %vm295, %v452, 0.0
        %480 = vadd.xlane.f32.xlu0 %v479
        %v481 = vpop.xlane.xlu0 %480
        %v482 = vsel %vm295, %v453, 0.0
        %483 = vadd.xlane.f32.xlu0 %v482
        %v484 = vpop.xlane.xlu0 %483
        %v485 = vsel %vm295, %v454, 0.0
        %486 = vadd.xlane.f32.xlu0 %v485
        %v487 = vpop.xlane.xlu0 %486
        %v488 = vsel %vm295, %v455, 0.0
        %489 = vadd.xlane.f32.xlu0 %v488
        %v490 = vpop.xlane.xlu0 %489
        %v491 = vsel %vm295, %v456, 0.0
        %492 = vadd.xlane.f32.xlu0 %v491
        %v493 = vpop.xlane.xlu0 %492
        %v494 = vsel %vm295, %v457, 0.0
        %495 = vadd.xlane.f32.xlu0 %v494
        %v496 = vpop.xlane.xlu0 %495
        %v497 = vsel %vm295, %v458, 0.0
        %498 = vadd.xlane.f32.xlu0 %v497
        %v499 = vpop.xlane.xlu0 %498
        %v500 = vsel %vm295, %v459, 0.0
        %501 = vadd.xlane.f32.xlu0 %v500
        %v502 = vpop.xlane.xlu0 %501
        %v503 = vsel %vm295, %v460, 0.0
        %504 = vadd.xlane.f32.xlu0 %v503
        %v505 = vpop.xlane.xlu0 %504
        %v506 = vmul.f32 %v431, %v431
        %v507 = vmul.f32 %v432, %v432
        %v508 = vmul.f32 %v433, %v433
        %v509 = vmul.f32 %v434, %v434
        %v510 = vmul.f32 %v435, %v435
        %v511 = vmul.f32 %v436, %v436
        %v512 = vmul.f32 %v437, %v437
        %v513 = vmul.f32 %v438, %v438
        %v514 = vmul.f32 %v439, %v439
        %v515 = vmul.f32 %v440, %v440
        %v516 = vmul.f32 %v441, %v441
        %v517 = vmul.f32 %v442, %v442
        %v518 = vmul.f32 %v443, %v443
        %v519 = vmul.f32 %v444, %v444
        %v520 = vmul.f32 %v445, %v445
        %v521 = vsel %vm295, %v506, 0.0
        %522 = vadd.xlane.f32.xlu0 %v521
        %v523 = vpop.xlane.xlu0 %522
        %v524 = vsel %vm295, %v507, 0.0
        %525 = vadd.xlane.f32.xlu0 %v524
        %v526 = vpop.xlane.xlu0 %525
        %v527 = vsel %vm295, %v508, 0.0
        %528 = vadd.xlane.f32.xlu0 %v527
        %v529 = vpop.xlane.xlu0 %528
        %v530 = vsel %vm295, %v509, 0.0
        %531 = vadd.xlane.f32.xlu0 %v530
        %v532 = vpop.xlane.xlu0 %531
        %v533 = vsel %vm295, %v510, 0.0
        %534 = vadd.xlane.f32.xlu0 %v533
        %v535 = vpop.xlane.xlu0 %534
        %v536 = vsel %vm295, %v511, 0.0
        %537 = vadd.xlane.f32.xlu0 %v536
        %v538 = vpop.xlane.xlu0 %537
        %v539 = vsel %vm295, %v512, 0.0
        %540 = vadd.xlane.f32.xlu0 %v539
        %v541 = vpop.xlane.xlu0 %540
        %v542 = vsel %vm295, %v513, 0.0
        %543 = vadd.xlane.f32.xlu0 %v542
        %v544 = vpop.xlane.xlu0 %543
        %v545 = vsel %vm295, %v514, 0.0
        %546 = vadd.xlane.f32.xlu0 %v545
        %v547 = vpop.xlane.xlu0 %546
        %v548 = vsel %vm295, %v515, 0.0
        %549 = vadd.xlane.f32.xlu0 %v548
        %v550 = vpop.xlane.xlu0 %549
        %v551 = vsel %vm295, %v516, 0.0
        %552 = vadd.xlane.f32.xlu0 %v551
        %v553 = vpop.xlane.xlu0 %552
        %v554 = vsel %vm295, %v517, 0.0
        %555 = vadd.xlane.f32.xlu0 %v554
        %v556 = vpop.xlane.xlu0 %555
        %v557 = vsel %vm295, %v518, 0.0
        %558 = vadd.xlane.f32.xlu0 %v557
        %v559 = vpop.xlane.xlu0 %558
        %v560 = vsel %vm295, %v519, 0.0
        %561 = vadd.xlane.f32.xlu0 %v560
        %v562 = vpop.xlane.xlu0 %561
        %v563 = vsel %vm295, %v520, 0.0
        %564 = vadd.xlane.f32.xlu0 %v563
        %v565 = vpop.xlane.xlu0 %564
        %v566 = vadd.f32 %v463, %v523
        %v567 = vadd.f32 %v466, %v526
        %v568 = vadd.f32 %v469, %v529
        %v569 = vadd.f32 %v472, %v532
        %v570 = vadd.f32 %v475, %v535
        %v571 = vadd.f32 %v478, %v538
        %v572 = vadd.f32 %v481, %v541
        %v573 = vadd.f32 %v484, %v544
        %v574 = vadd.f32 %v487, %v547
        %v575 = vadd.f32 %v490, %v550
        %v576 = vadd.f32 %v493, %v553
        %v577 = vadd.f32 %v496, %v556
        %v578 = vadd.f32 %v499, %v559
        %v579 = vadd.f32 %v502, %v562
        %v580 = vadd.f32 %v505, %v565
        %v581 = vmul.f32 %v566, 0.015625
        %v582 = vmul.f32 %v567, 0.015625
        %v583 = vmul.f32 %v568, 0.015625
        %v584 = vmul.f32 %v569, 0.015625
        %v585 = vmul.f32 %v570, 0.015625
        %v586 = vmul.f32 %v571, 0.015625
        %v587 = vmul.f32 %v572, 0.015625
        %v588 = vmul.f32 %v573, 0.015625
        %v589 = vmul.f32 %v574, 0.015625
        %v590 = vmul.f32 %v575, 0.015625
        %v591 = vmul.f32 %v576, 0.015625
        %v592 = vmul.f32 %v577, 0.015625
        %v593 = vmul.f32 %v578, 0.015625
        %v594 = vmul.f32 %v579, 0.015625
        %v595 = vmul.f32 %v580, 0.015625
        %v596 = vadd.f32 %v581, 1e-05
        %v597 = vadd.f32 %v582, 1e-05
        %v598 = vadd.f32 %v583, 1e-05
        %v599 = vadd.f32 %v584, 1e-05
        %v600 = vadd.f32 %v585, 1e-05
        %v601 = vadd.f32 %v586, 1e-05
        %v602 = vadd.f32 %v587, 1e-05
        %v603 = vadd.f32 %v588, 1e-05
        %v604 = vadd.f32 %v589, 1e-05
        %v605 = vadd.f32 %v590, 1e-05
        %v606 = vadd.f32 %v591, 1e-05
        %v607 = vadd.f32 %v592, 1e-05
        %v608 = vadd.f32 %v593, 1e-05
        %v609 = vadd.f32 %v594, 1e-05
        %v610 = vadd.f32 %v595, 1e-05
        %v611 = vrsqrt.pop %v596
        %v612 = vrsqrt.pop %v597
        %v613 = vrsqrt.pop %v598
        %v614 = vrsqrt.pop %v599
        %v615 = vrsqrt.pop %v600
        %v616 = vrsqrt.pop %v601
        %v617 = vrsqrt.pop %v602
        %v618 = vrsqrt.pop %v603
        %v619 = vrsqrt.pop %v604
        %v620 = vrsqrt.pop %v605
        %v621 = vrsqrt.pop %v606
        %v622 = vrsqrt.pop %v607
        %v623 = vrsqrt.pop %v608
        %v624 = vrsqrt.pop %v609
        %v625 = vrsqrt.pop %v610
        %v626 = vmul.f32 %v416, %v611
        %v627 = vmul.f32 %v417, %v612
        %v628 = vmul.f32 %v418, %v613
        %v629 = vmul.f32 %v419, %v614
        %v630 = vmul.f32 %v420, %v615
        %v631 = vmul.f32 %v421, %v616
        %v632 = vmul.f32 %v422, %v617
        %v633 = vmul.f32 %v423, %v618
        %v634 = vmul.f32 %v424, %v619
        %v635 = vmul.f32 %v425, %v620
        %v636 = vmul.f32 %v426, %v621
        %v637 = vmul.f32 %v427, %v622
        %v638 = vmul.f32 %v428, %v623
        %v639 = vmul.f32 %v429, %v624
        %v640 = vmul.f32 %v430, %v625
        %v641 = vmul.f32 %v431, %v611
        %v642 = vmul.f32 %v432, %v612
        %v643 = vmul.f32 %v433, %v613
        %v644 = vmul.f32 %v434, %v614
        %v645 = vmul.f32 %v435, %v615
        %v646 = vmul.f32 %v436, %v616
        %v647 = vmul.f32 %v437, %v617
        %v648 = vmul.f32 %v438, %v618
        %v649 = vmul.f32 %v439, %v619
        %v650 = vmul.f32 %v440, %v620
        %v651 = vmul.f32 %v441, %v621
        %v652 = vmul.f32 %v442, %v622
        %v653 = vmul.f32 %v443, %v623
        %v654 = vmul.f32 %v444, %v624
        %v655 = vmul.f32 %v445, %v625
        %v656 = vld [vmem:[#allocation5] sm:$0xff]
        %v657 = vld [vmem:[#allocation5 + $0x8] sm:$0xff]
        %v658 = vld [vmem:[#allocation5 + $0x10] sm:$0xff]
        %v659 = vld [vmem:[#allocation5 + $0x18] sm:$0xff]
        %v660 = vld [vmem:[#allocation7] sm:$0xff]
        %v661 = vld [vmem:[#allocation7 + $0x8] sm:$0xff]
        %v662 = vld [vmem:[#allocation7 + $0x10] sm:$0xff]
        %v663 = vld [vmem:[#allocation7 + $0x18] sm:$0xff]
        %v665 = vsel %vm295, %v641, 0
        %v668 = vsel %vm295, %v642, 0
        %v671 = vsel %vm295, %v643, 0
        %v674 = vsel %vm295, %v644, 0
        %v677 = vsel %vm295, %v645, 0
        %v680 = vsel %vm295, %v646, 0
        %v683 = vsel %vm295, %v647, 0
        %v686 = vsel %vm295, %v648, 0
        %v689 = vsel %vm295, %v649, 0
        %v692 = vsel %vm295, %v650, 0
        %v695 = vsel %vm295, %v651, 0
        %v698 = vsel %vm295, %v652, 0
        %v701 = vsel %vm295, %v653, 0
        %v704 = vsel %vm295, %v654, 0
        %v707 = vsel %vm295, %v655, 0
        %709 = vmatprep.subr.mxu0 0.0
        %710 = vmatpush1.msra.mxu0 0.0
        %711 = vmatprep.subr.mxu0 0.0
        %712 = vmatpush1.msra.mxu0 0.0
        %713 = vmatprep.subr.mxu0 0.0
        %714 = vmatpush1.msra.mxu0 0.0
        %715 = vmatprep.subr.mxu0 0.0
        %716 = vmatpush1.msra.mxu0 0.0
        %717 = vmatprep.subr.mxu0 0.0
        %718 = vmatpush1.msra.mxu0 0.0
        %719 = vmatprep.subr.mxu0 0.0
        %720 = vmatpush1.msra.mxu0 0.0
        %721 = vmatprep.subr.mxu0 0.0
        %722 = vmatpush1.msra.mxu0 0.0
        %723 = vmatprep.subr.mxu0 0.0
        %724 = vmatpush1.msra.mxu0 0.0
        %725 = vmatprep.subr.mxu0 0.0
        %726 = vmatpush1.msra.mxu0 0.0
        %727 = vmatprep.subr.mxu0 0.0
        %728 = vmatpush1.msra.mxu0 0.0
        %729 = vmatprep.subr.mxu0 0.0
        %730 = vmatpush1.msra.mxu0 0.0
        %731 = vmatprep.subr.mxu0 0.0
        %732 = vmatpush1.msra.mxu0 0.0
        %733 = vmatprep.subr.mxu0 0.0
        %734 = vmatpush1.msra.mxu0 %v663
        %735 = vmatprep.subr.mxu0 0.0
        %736 = vmatpush1.msra.mxu0 %v662
        %737 = vmatprep.subr.mxu0 0.0
        %738 = vmatpush1.msra.mxu0 %v661
        %739 = vmatprep.subr.mxu0 0.0
        %740 = vmatpush1.msra.mxu0 %v660
        %741 = vmatprep.subr.mxu0 0.0
        %742 = vmatpush2.msra.mxu0 0.0
        %743 = vmatprep.subr.mxu0 0.0
        %744 = vmatpush2.msra.mxu0 0.0
        %745 = vmatprep.subr.mxu0 0.0
        %746 = vmatpush2.msra.mxu0 0.0
        %747 = vmatprep.subr.mxu0 0.0
        %748 = vmatpush2.msra.mxu0 0.0
        %749 = vmatprep.subr.mxu0 0.0
        %750 = vmatpush2.msra.mxu0 0.0
        %751 = vmatprep.subr.mxu0 0.0
        %752 = vmatpush2.msra.mxu0 0.0
        %753 = vmatprep.subr.mxu0 0.0
        %754 = vmatpush2.msra.mxu0 0.0
        %755 = vmatprep.subr.mxu0 0.0
        %756 = vmatpush2.msra.mxu0 0.0
        %757 = vmatprep.subr.mxu0 0.0
        %758 = vmatpush2.msra.mxu0 0.0
        %759 = vmatprep.subr.mxu0 0.0
        %760 = vmatpush2.msra.mxu0 0.0
        %761 = vmatprep.subr.mxu0 0.0
        %762 = vmatpush2.msra.mxu0 0.0
        %763 = vmatprep.subr.mxu0 0.0
        %764 = vmatpush2.msra.mxu0 0.0
        %765 = vmatprep.subr.mxu0 0.0
        %766 = vmatpush2.msra.mxu0 0.0
        %767 = vmatprep.subr.mxu0 0.0
        %768 = vmatpush2.msra.mxu0 0.0
        %769 = vmatprep.subr.mxu0 0.0
        %770 = vmatpush2.msra.mxu0 0.0
        %771 = vmatprep.subr.mxu0 0.0
        %772 = vmatpush2.msra.mxu0 0.0
        %773 = vmatprep.mubr.f32.mxu0 0.0
        %774 = vmatmul.mubr.f32.gmra.mxu0 %v665
        %v775 = vpop.f32.mrf.mxu0
        %v776 = vadd.f32 0.0, %v775
        %v777 = vpop.f32.mrf.mxu0
        %778 = vmatprep.mubr.f32.mxu0 0.0
        %779 = vmatmul.mubr.f32.gmra.mxu0 %v668
        %v780 = vpop.f32.mrf.mxu0
        %v781 = vadd.f32 0.0, %v780
        %v782 = vpop.f32.mrf.mxu0
        %783 = vmatprep.mubr.f32.mxu0 0.0
        %784 = vmatmul.mubr.f32.gmra.mxu0 %v671
        %v785 = vpop.f32.mrf.mxu0
        %v786 = vadd.f32 0.0, %v785
        %v787 = vpop.f32.mrf.mxu0
        %788 = vmatprep.mubr.f32.mxu0 0.0
        %789 = vmatmul.mubr.f32.gmra.mxu0 %v674
        %v790 = vpop.f32.mrf.mxu0
        %v791 = vadd.f32 0.0, %v790
        %v792 = vpop.f32.mrf.mxu0
        %793 = vmatprep.mubr.f32.mxu0 0.0
        %794 = vmatmul.mubr.f32.gmra.mxu0 %v677
        %v795 = vpop.f32.mrf.mxu0
        %v796 = vadd.f32 0.0, %v795
        %v797 = vpop.f32.mrf.mxu0
        %798 = vmatprep.mubr.f32.mxu0 0.0
        %799 = vmatmul.mubr.f32.gmra.mxu0 %v680
        %v800 = vpop.f32.mrf.mxu0
        %v801 = vadd.f32 0.0, %v800
        %v802 = vpop.f32.mrf.mxu0
        %803 = vmatprep.mubr.f32.mxu0 0.0
        %804 = vmatmul.mubr.f32.gmra.mxu0 %v683
        %v805 = vpop.f32.mrf.mxu0
        %v806 = vadd.f32 0.0, %v805
        %v807 = vpop.f32.mrf.mxu0
        %808 = vmatprep.mubr.f32.mxu0 0.0
        %809 = vmatmul.mubr.f32.gmra.mxu0 %v686
        %v810 = vpop.f32.mrf.mxu0
        %v811 = vadd.f32 0.0, %v810
        %v812 = vpop.f32.mrf.mxu0
        %813 = vmatprep.mubr.f32.mxu0 0.0
        %814 = vmatmul.mubr.f32.gmra.mxu0 %v689
        %v815 = vpop.f32.mrf.mxu0
        %v816 = vadd.f32 0.0, %v815
        %v817 = vpop.f32.mrf.mxu0
        %818 = vmatprep.mubr.f32.mxu0 0.0
        %819 = vmatmul.mubr.f32.gmra.mxu0 %v692
        %v820 = vpop.f32.mrf.mxu0
        %v821 = vadd.f32 0.0, %v820
        %v822 = vpop.f32.mrf.mxu0
        %823 = vmatprep.mubr.f32.mxu0 0.0
        %824 = vmatmul.mubr.f32.gmra.mxu0 %v695
        %v825 = vpop.f32.mrf.mxu0
        %v826 = vadd.f32 0.0, %v825
        %v827 = vpop.f32.mrf.mxu0
        %828 = vmatprep.mubr.f32.mxu0 0.0
        %829 = vmatmul.mubr.f32.gmra.mxu0 %v698
        %v830 = vpop.f32.mrf.mxu0
        %v831 = vadd.f32 0.0, %v830
        %v832 = vpop.f32.mrf.mxu0
        %833 = vmatprep.mubr.f32.mxu0 0.0
        %834 = vmatmul.mubr.f32.gmra.mxu0 %v701
        %v835 = vpop.f32.mrf.mxu0
        %v836 = vadd.f32 0.0, %v835
        %v837 = vpop.f32.mrf.mxu0
        %838 = vmatprep.mubr.f32.mxu0 0.0
        %839 = vmatmul.mubr.f32.gmra.mxu0 %v704
        %v840 = vpop.f32.mrf.mxu0
        %v841 = vadd.f32 0.0, %v840
        %v842 = vpop.f32.mrf.mxu0
        %843 = vmatprep.mubr.f32.mxu0 0.0
        %844 = vmatmul.mubr.f32.gmra.mxu0 %v707
        %v845 = vpop.f32.mrf.mxu0
        %v846 = vadd.f32 0.0, %v845
        %v847 = vpop.f32.mrf.mxu0
        %848 = vdwg.mxu0
        %v850 = vsel %vm295, %v626, 0
        %v853 = vsel %vm295, %v627, 0
        %v856 = vsel %vm295, %v628, 0
        %v859 = vsel %vm295, %v629, 0
        %v862 = vsel %vm295, %v630, 0
        %v865 = vsel %vm295, %v631, 0
        %v868 = vsel %vm295, %v632, 0
        %v871 = vsel %vm295, %v633, 0
        %v874 = vsel %vm295, %v634, 0
        %v877 = vsel %vm295, %v635, 0
        %v880 = vsel %vm295, %v636, 0
        %v883 = vsel %vm295, %v637, 0
        %v886 = vsel %vm295, %v638, 0
        %v889 = vsel %vm295, %v639, 0
        %v892 = vsel %vm295, %v640, 0
        %894 = vmatprep.subr.mxu0 0.0
        %895 = vmatpush1.msra.mxu0 0.0
        %896 = vmatprep.subr.mxu0 0.0
        %897 = vmatpush1.msra.mxu0 0.0
        %898 = vmatprep.subr.mxu0 0.0
        %899 = vmatpush1.msra.mxu0 0.0
        %900 = vmatprep.subr.mxu0 0.0
        %901 = vmatpush1.msra.mxu0 0.0
        %902 = vmatprep.subr.mxu0 0.0
        %903 = vmatpush1.msra.mxu0 0.0
        %904 = vmatprep.subr.mxu0 0.0
        %905 = vmatpush1.msra.mxu0 0.0
        %906 = vmatprep.subr.mxu0 0.0
        %907 = vmatpush1.msra.mxu0 0.0
        %908 = vmatprep.subr.mxu0 0.0
        %909 = vmatpush1.msra.mxu0 0.0
        %910 = vmatprep.subr.mxu0 0.0
        %911 = vmatpush1.msra.mxu0 0.0
        %912 = vmatprep.subr.mxu0 0.0
        %913 = vmatpush1.msra.mxu0 0.0
        %914 = vmatprep.subr.mxu0 0.0
        %915 = vmatpush1.msra.mxu0 0.0
        %916 = vmatprep.subr.mxu0 0.0
        %917 = vmatpush1.msra.mxu0 0.0
        %918 = vmatprep.subr.mxu0 0.0
        %919 = vmatpush1.msra.mxu0 %v659
        %920 = vmatprep.subr.mxu0 0.0
        %921 = vmatpush1.msra.mxu0 %v658
        %922 = vmatprep.subr.mxu0 0.0
        %923 = vmatpush1.msra.mxu0 %v657
        %924 = vmatprep.subr.mxu0 0.0
        %925 = vmatpush1.msra.mxu0 %v656
        %926 = vmatprep.subr.mxu0 0.0
        %927 = vmatpush2.msra.mxu0 0.0
        %928 = vmatprep.subr.mxu0 0.0
        %929 = vmatpush2.msra.mxu0 0.0
        %930 = vmatprep.subr.mxu0 0.0
        %931 = vmatpush2.msra.mxu0 0.0
        %932 = vmatprep.subr.mxu0 0.0
        %933 = vmatpush2.msra.mxu0 0.0
        %934 = vmatprep.subr.mxu0 0.0
        %935 = vmatpush2.msra.mxu0 0.0
        %936 = vmatprep.subr.mxu0 0.0
        %937 = vmatpush2.msra.mxu0 0.0
        %938 = vmatprep.subr.mxu0 0.0
        %939 = vmatpush2.msra.mxu0 0.0
        %940 = vmatprep.subr.mxu0 0.0
        %941 = vmatpush2.msra.mxu0 0.0
        %942 = vmatprep.subr.mxu0 0.0
        %943 = vmatpush2.msra.mxu0 0.0
        %944 = vmatprep.subr.mxu0 0.0
        %945 = vmatpush2.msra.mxu0 0.0
        %946 = vmatprep.subr.mxu0 0.0
        %947 = vmatpush2.msra.mxu0 0.0
        %948 = vmatprep.subr.mxu0 0.0
        %949 = vmatpush2.msra.mxu0 0.0
        %950 = vmatprep.subr.mxu0 0.0
        %951 = vmatpush2.msra.mxu0 0.0
        %952 = vmatprep.subr.mxu0 0.0
        %953 = vmatpush2.msra.mxu0 0.0
        %954 = vmatprep.subr.mxu0 0.0
        %955 = vmatpush2.msra.mxu0 0.0
        %956 = vmatprep.subr.mxu0 0.0
        %957 = vmatpush2.msra.mxu0 0.0
        %958 = vmatprep.mubr.f32.mxu0 0.0
        %959 = vmatmul.mubr.f32.gmra.mxu0 %v850
        %v960 = vpop.f32.mrf.mxu0
        %v961 = vadd.f32 %v776, %v960
        %v962 = vpop.f32.mrf.mxu0
        %963 = vmatprep.mubr.f32.mxu0 0.0
        %964 = vmatmul.mubr.f32.gmra.mxu0 %v853
        %v965 = vpop.f32.mrf.mxu0
        %v966 = vadd.f32 %v781, %v965
        %v967 = vpop.f32.mrf.mxu0
        %968 = vmatprep.mubr.f32.mxu0 0.0
        %969 = vmatmul.mubr.f32.gmra.mxu0 %v856
        %v970 = vpop.f32.mrf.mxu0
        %v971 = vadd.f32 %v786, %v970
        %v972 = vpop.f32.mrf.mxu0
        %973 = vmatprep.mubr.f32.mxu0 0.0
        %974 = vmatmul.mubr.f32.gmra.mxu0 %v859
        %v975 = vpop.f32.mrf.mxu0
        %v976 = vadd.f32 %v791, %v975
        %v977 = vpop.f32.mrf.mxu0
        %978 = vmatprep.mubr.f32.mxu0 0.0
        %979 = vmatmul.mubr.f32.gmra.mxu0 %v862
        %v980 = vpop.f32.mrf.mxu0
        %v981 = vadd.f32 %v796, %v980
        %v982 = vpop.f32.mrf.mxu0
        %983 = vmatprep.mubr.f32.mxu0 0.0
        %984 = vmatmul.mubr.f32.gmra.mxu0 %v865
        %v985 = vpop.f32.mrf.mxu0
        %v986 = vadd.f32 %v801, %v985
        %v987 = vpop.f32.mrf.mxu0
        %988 = vmatprep.mubr.f32.mxu0 0.0
        %989 = vmatmul.mubr.f32.gmra.mxu0 %v868
        %v990 = vpop.f32.mrf.mxu0
        %v991 = vadd.f32 %v806, %v990
        %v992 = vpop.f32.mrf.mxu0
        %993 = vmatprep.mubr.f32.mxu0 0.0
        %994 = vmatmul.mubr.f32.gmra.mxu0 %v871
        %v995 = vpop.f32.mrf.mxu0
        %v996 = vadd.f32 %v811, %v995
        %v997 = vpop.f32.mrf.mxu0
        %998 = vmatprep.mubr.f32.mxu0 0.0
        %999 = vmatmul.mubr.f32.gmra.mxu0 %v874
        %v1000 = vpop.f32.mrf.mxu0
        %v1001 = vadd.f32 %v816, %v1000
        %v1002 = vpop.f32.mrf.mxu0
        %1003 = vmatprep.mubr.f32.mxu0 0.0
        %1004 = vmatmul.mubr.f32.gmra.mxu0 %v877
        %v1005 = vpop.f32.mrf.mxu0
        %v1006 = vadd.f32 %v821, %v1005
        %v1007 = vpop.f32.mrf.mxu0
        %1008 = vmatprep.mubr.f32.mxu0 0.0
        %1009 = vmatmul.mubr.f32.gmra.mxu0 %v880
        %v1010 = vpop.f32.mrf.mxu0
        %v1011 = vadd.f32 %v826, %v1010
        %v1012 = vpop.f32.mrf.mxu0
        %1013 = vmatprep.mubr.f32.mxu0 0.0
        %1014 = vmatmul.mubr.f32.gmra.mxu0 %v883
        %v1015 = vpop.f32.mrf.mxu0
        %v1016 = vadd.f32 %v831, %v1015
        %v1017 = vpop.f32.mrf.mxu0
        %1018 = vmatprep.mubr.f32.mxu0 0.0
        %1019 = vmatmul.mubr.f32.gmra.mxu0 %v886
        %v1020 = vpop.f32.mrf.mxu0
        %v1021 = vadd.f32 %v836, %v1020
        %v1022 = vpop.f32.mrf.mxu0
        %1023 = vmatprep.mubr.f32.mxu0 0.0
        %1024 = vmatmul.mubr.f32.gmra.mxu0 %v889
        %v1025 = vpop.f32.mrf.mxu0
        %v1026 = vadd.f32 %v841, %v1025
        %v1027 = vpop.f32.mrf.mxu0
        %1028 = vmatprep.mubr.f32.mxu0 0.0
        %1029 = vmatmul.mubr.f32.gmra.mxu0 %v892
        %v1030 = vpop.f32.mrf.mxu0
        %v1031 = vadd.f32 %v846, %v1030
        %v1032 = vpop.f32.mrf.mxu0
        %1033 = vdwg.mxu0
        %v1034 = vld [vmem:[%s3] sm:$0x1]
        %v1036 = vlaneseq
        %v1037 = vshrl.u32 %v1036, 7
        %v1038 = vsub.s32 0, %v1037
        %v1039 = vrot.slane %v1034, %v1038
        %v1041 = vadd.f32 %v961, %v1039
        %v1042 = vadd.f32 %v966, %v1039
        %v1043 = vadd.f32 %v971, %v1039
        %v1044 = vadd.f32 %v976, %v1039
        %v1045 = vadd.f32 %v981, %v1039
        %v1046 = vadd.f32 %v986, %v1039
        %v1047 = vadd.f32 %v991, %v1039
        %v1048 = vadd.f32 %v996, %v1039
        %v1049 = vadd.f32 %v1001, %v1039
        %v1050 = vadd.f32 %v1006, %v1039
        %v1051 = vadd.f32 %v1011, %v1039
        %v1052 = vadd.f32 %v1016, %v1039
        %v1053 = vadd.f32 %v1021, %v1039
        %v1054 = vadd.f32 %v1026, %v1039
        %v1055 = vadd.f32 %v1031, %v1039
        %1056 = vst [vmem:[%s253] sm:$0xff] %v1041
        %1057 = vst [vmem:[%s253 + $0x8] sm:$0xff] %v1042
        %1058 = vst [vmem:[%s253 + $0x10] sm:$0xff] %v1043
        %1059 = vst [vmem:[%s253 + $0x18] sm:$0xff] %v1044
        %1060 = vst [vmem:[%s253 + $0x20] sm:$0xff] %v1045
        %1061 = vst [vmem:[%s253 + $0x28] sm:$0xff] %v1046
        %1062 = vst [vmem:[%s253 + $0x30] sm:$0xff] %v1047
        %1063 = vst [vmem:[%s253 + $0x38] sm:$0xff] %v1048
        %1064 = vst [vmem:[%s253 + $0x40] sm:$0xff] %v1049
        %1065 = vst [vmem:[%s253 + $0x48] sm:$0xff] %v1050
        %1066 = vst [vmem:[%s253 + $0x50] sm:$0xff] %v1051
        %1067 = vst [vmem:[%s253 + $0x58] sm:$0xff] %v1052
        %1068 = vst [vmem:[%s253 + $0x60] sm:$0xff] %v1053
        %1069 = vst [vmem:[%s253 + $0x68] sm:$0xff] %v1054
        %1070 = vst [vmem:[%s253 + $0x70] sm:$0xff] %v1055
        %s1071 = sand.u32 %s119, 1
        %s1072 = scalar_lea.sflag [#allocation4], %s1071
        %s1073 = sand.u32 %s119, 1
        %s1074 = smul.addr %s1073, 120
        %s1075 = scalar_lea.vmem [#allocation8], %s1074
        // Predicated region
        $region49: #{tpu_custom_call.1} parent=35 // pred_check
          %p1076 = pneg %p129
        $region50: #{tpu_custom_call.1} parent=35 // pred_check_branch
          %1078 = sbr.rel (%p1076) target = $region52
        $region51: #{tpu_custom_call.1} parent=35 // pred_region
          %s1079 = smul.u32 15, %s22
          %s1080 = ssub.s32 16, %s1079
          %p1081 = scmp.lt.s32.totalorder %s1080, 15
          %s1082 = scalar_select %p1081, %s1080, 15
          %s1083 = smul.u32 128, %s1082
          %s1085 = ssub.s32 1920, %s1083
          %1086 = vsyncadd %s1072, %s1085
          %p1087 = scmp.ne.s32.totalorder 0, %s1083
          %s1088 = smul.addr %s1079, 128
          %s1089 = scalar_lea.hbm %s4, %s1088
          %s1090 = smul.u32 8, %s1082
          %s1091 = sshll.u32 %s1075, 4
          %s1092 = int_to_ptr.vmem [resolvable:$true] %s1091
          %s1093 = sshll.u32 %s1090, 4
          %1097 = dma.vmem_to_hbm [thread:$0]  (%p1087), %s1092, %s1093, %s1089, %s1072, 128, 128, 8
        $region52: #{tpu_custom_call.1} parent=35 // pred_fallthru
          _
      $region36: #{tpu_custom_call.1} parent=5 // pred_fallthru
        _
      %p1098 = scmp.le.s32.totalorder 2, %s17
      // Predicated region
      $region53: #{tpu_custom_call.1} parent=5 // pred_check
        %p1099 = pneg %p1098
      $region54: #{tpu_custom_call.1} parent=5 // pred_check_branch
        %1101 = sbr.rel (%p1099) target = $region56
      $region55: #{tpu_custom_call.1} parent=5 // pred_region
        %s1102 = ssub.s32 %s17, 2
        // Predicated region
        $region57: #{tpu_custom_call.1} parent=55 // pred_check
          %p1103 = pneg %p135
        $region58: #{tpu_custom_call.1} parent=55 // pred_check_branch
          %1105 = sbr.rel (%p1103) target = $region60
        $region59: #{tpu_custom_call.1} parent=55 // pred_region
          %s1106 = sand.u32 %s120, 1
          %s1107 = scalar_lea.sflag [#allocation4], %s1106
          %s1108 = sand.u32 %s120, 1
          %s1109 = smul.addr %s1108, 120
          %s1110 = scalar_lea.vmem [#allocation8], %s1109
          %1111 = dma.done %s1107, 1920
        $region60: #{tpu_custom_call.1} parent=55 // pred_fallthru
          _
      $region56: #{tpu_custom_call.1} parent=5 // pred_fallthru
        _
    $region6: #{tpu_custom_call.1} parent=1 // loop_footer
      %s21 = sadd.s32 1, %s17
    $region7: #{tpu_custom_call.1} parent=1 // loop_footer_branch
      %16 = sbr.rel target = $region3
    $region8: #{tpu_custom_call.1} parent=1 // loop_exit
      _
    %1112 = vsyncpa [#allocation3], 1
    %s1113 = scalar_lea.sflag [#allocation3], 1
    %1114 = vsyncpa %s1113, 1
    %1115 = vsyncpa [#allocation6], 1
    %1116 = vsyncpa [#allocation4], 1
    %s1117 = scalar_lea.sflag [#allocation4], 1
    %1118 = vsyncpa %s1117, 1

</llo_original>
